<compile_context>
chip_gen: v6e
topology: v6e:2x2x1
jax: 0.10.0
libtpu: 0.0.40
codegen_flags: <defaults>
</compile_context>

<pallas_src>
import functools

import jax
import jax.numpy as jnp
from jax.experimental import pallas as pl
from jax.experimental.pallas import tpu as pltpu

EPS = 1e-5  # nn.LayerNorm default
_LANE = 128


def _round_up(x, m):
    return (x + m - 1) // m * m


def _sublane(dtype):
    # minimal second-minor tile per element width (f32: 8, bf16: 16, int8: 32)
    return {4: 8, 2: 16, 1: 32}.get(jnp.dtype(dtype).itemsize, 8)


def _tpu_params():
    """Generation-aware defaults: bigger tiles / limits on 128 MiB-VMEM parts."""
    try:
        vmem_cap = pltpu.get_tpu_info().vmem_capacity_bytes
    except Exception:
        vmem_cap = 64 * 1024 * 1024  # unknown -> assume small (v7x-sized) VMEM
    if vmem_cap >= 96 * 1024 * 1024:          # v5e / v6e: 128 MiB physical
        return {"tm": 512, "vmem_limit": 100 * 1024 * 1024}
    return {"tm": 256, "vmem_limit": 48 * 1024 * 1024}   # v7x: 64 MiB physical


@functools.lru_cache(maxsize=None)
def _single_buffer_supported():
    """Explicit feature probe (one tiny kernel) for pipeline_mode=Buffered(1)."""
    if not hasattr(pl, "Buffered"):
        return False
    try:
        spec = pl.BlockSpec((8, 128), lambda i: (0, 0),
                            pipeline_mode=pl.Buffered(buffer_count=1))
    except TypeError:
        return False
    try:
        def _probe(x_ref, o_ref):
            o_ref[...] = x_ref[...]
        x = jnp.zeros((8, 128), jnp.float32)
        pl.pallas_call(
            _probe,
            out_shape=jax.ShapeDtypeStruct((8, 128), jnp.float32),
            grid=(1,),
            in_specs=[spec],
            out_specs=pl.BlockSpec((8, 128), lambda i: (0, 0)),
        )(x)
        return True
    except Exception:
        return False


def _ln_mixer(res, g_ref, be_ref, w_ref, b_ref, out_ref, *, valid_d):
    """LayerNorm (f32 statistics) + bf16-operand / f32-accumulate MXU matmul.

    `res` is the (tm, dp) f32 residual slab; out_ref is a (tm, tn) column tile.
    """
    dp = res.shape[-1]
    inv_d = 1.0 / float(valid_d)
    mean = jnp.sum(res, axis=-1, keepdims=True) * inv_d
    cent = res - mean
    if valid_d != dp:
        # Padded columns of `res` are exactly zero (wrapper zero-pads), so the
        # mean is already correct; mask them out of the variance only.
        col = jax.lax.broadcasted_iota(jnp.int32, (1, dp), 1)
        cent_v = cent * (col < valid_d).astype(res.dtype)
    else:
        cent_v = cent
    var = jnp.sum(cent_v * cent_v, axis=-1, keepdims=True) * inv_d
    y = cent * jax.lax.rsqrt(var + EPS) * g_ref[...] + be_ref[...]
    out = jnp.dot(y.astype(jnp.bfloat16), w_ref[...],
                  preferred_element_type=jnp.float32) + b_ref[...]
    out_ref[...] = out.astype(out_ref.dtype)


def _block_kernel_add(h_ref, r_ref, g_ref, be_ref, w_ref, b_ref,
                      out_ref, res_ref, *, valid_d):
    # native-dtype (possibly bf16) streams, upcast to f32 in VMEM
    res = r_ref[...].astype(jnp.float32) + h_ref[...].astype(jnp.float32)

    @pl.when(pl.program_id(1) == 0)          # residual written once per row tile
    def _():
        res_ref[...] = res

    _ln_mixer(res, g_ref, be_ref, w_ref, b_ref, out_ref, valid_d=valid_d)


def _block_kernel_first(h_ref, g_ref, be_ref, w_ref, b_ref,
                        out_ref, res_ref, *, valid_d):
    res = h_ref[...].astype(jnp.float32)      # residual is None -> residual = h

    @pl.when(pl.program_id(1) == 0)
    def _():
        res_ref[...] = res

    _ln_mixer(res, g_ref, be_ref, w_ref, b_ref, out_ref, valid_d=valid_d)


def block_forward(hidden_states, residual, gamma, beta, w_t, b,
                  *, tm=None, tn=None, out_dtype=None):
    """hidden_states, residual: (B, L, D) (residual may be None, any float dtype).
    gamma, beta, b: (D,);  w_t: (D, D) already transposed (out = y @ w_t + b).
    Returns (mixer_out in `out_dtype` [default: hidden_states.dtype],
             residual in f32), both (B, L, D)."""
    B, L, D = hidden_states.shape
    rows = B * L
    dp = _round_up(D, _LANE)                   # lane-dense last dim
    if out_dtype is None:
        out_dtype = hidden_states.dtype

    hw = _tpu_params()
    if tm is None:
        tm = hw["tm"]
    vmem_limit = hw["vmem_limit"]

    # sublane granularity must satisfy the narrowest row-stream dtype
    row_dtypes = [hidden_states.dtype, jnp.float32, jnp.dtype(out_dtype)]
    if residual is not None:
        row_dtypes.append(residual.dtype)
    sub = max(_sublane(dt) for dt in row_dtypes)

    tm_eff = min(_round_up(tm, sub), _round_up(rows, sub))
    # make sure >= 2 row tiles exist so both v7x TensorCores get work
    if _round_up(rows, tm_eff) // tm_eff < 2 and tm_eff >= 2 * sub:
        tm_eff = _round_up(tm_eff // 2, sub)
    rows_p = _round_up(rows, tm_eff)

    # column-tile W (bounds its VMEM residency) only when it is large
    if tn is None:
        tn = dp if dp <= 2048 else next(
            t for t in (1024, 512, 256, 128) if dp % t == 0)
    n_col = dp // tn

    need_pad = (rows_p != rows) or (dp != D)

    def prep(x):  # keep native dtype; pad only when actually required
        x = x.reshape(rows, D)
        if need_pad:
            x = jnp.pad(x, ((0, rows_p - rows), (0, dp - D)))
        return x

    h2 = prep(hidden_states)
    gamma2 = jnp.pad(gamma.astype(jnp.float32), (0, dp - D)).reshape(1, dp)
    beta2 = jnp.pad(beta.astype(jnp.float32), (0, dp - D)).reshape(1, dp)
    b2 = jnp.pad(b.astype(jnp.float32), (0, dp - D)).reshape(1, dp)
    # bf16 weight: half the HBM/VMEM bytes, full-rate MXU on v5e/v6e/v7x.
    w2 = jnp.pad(w_t.astype(jnp.bfloat16), ((0, dp - D), (0, dp - D)))

    grid = (rows_p // tm_eff, n_col)

    # grid-invariant operands: single-buffer them when the feature exists
    inv_kw = ({"pipeline_mode": pl.Buffered(buffer_count=1)}
              if _single_buffer_supported() else {})
    w_kw = inv_kw if n_col == 1 else {}        # column-tiled W wants 2 buffers

    row_spec = pl.BlockSpec((tm_eff, dp), lambda i, j: (i, 0))
    vec_spec = pl.BlockSpec((1, dp), lambda i, j: (0, 0), **inv_kw)
    w_spec = pl.BlockSpec((dp, tn), lambda i, j: (0, j), **w_kw)
    bvec_spec = pl.BlockSpec((1, tn), lambda i, j: (0, j), **w_kw)
    out_spec = pl.BlockSpec((tm_eff, tn), lambda i, j: (i, j))
    res_spec = pl.BlockSpec((tm_eff, dp), lambda i, j: (i, 0))

    out_shapes = (jax.ShapeDtypeStruct((rows_p, dp), out_dtype),
                  jax.ShapeDtypeStruct((rows_p, dp), jnp.float32))

    cparams = pltpu.CompilerParams(
        dimension_semantics=("parallel", "arbitrary"),
        vmem_limit_bytes=vmem_limit)

    if residual is None:
        kernel = functools.partial(_block_kernel_first, valid_d=D)
        args = (h2,)
        in_specs = [row_spec]
    else:
        kernel = functools.partial(_block_kernel_add, valid_d=D)
        args = (h2, prep(residual))
        in_specs = [row_spec, row_spec]

    out_p, res_p = pl.pallas_call(
        kernel,
        out_shape=out_shapes,
        grid=grid,
        in_specs=in_specs + [vec_spec, vec_spec, w_spec, bvec_spec],
        out_specs=(out_spec, res_spec),
        compiler_params=cparams,
    )(*args, gamma2, beta2, w2, b2)

    if need_pad:
        out_p = out_p[:rows, :D]
        res_p = res_p[:rows, :D]
    return out_p.reshape(B, L, D), res_p.reshape(B, L, D)


def _reference(hidden_states, residual, gamma, beta, w_t, b):
    # pure-JAX f32 reference mirroring the PyTorch forward
    h = hidden_states.astype(jnp.float32)
    if residual is None:
        res = h
    else:
        res = residual.astype(jnp.float32) + h
    mean = jnp.mean(res, axis=-1, keepdims=True)
    var = jnp.mean((res - mean) ** 2, axis=-1, keepdims=True)
    y = (res - mean) / jnp.sqrt(var + EPS) * gamma + beta
    out = y @ w_t + b
    return out, res


if __name__ == "__main__":
    B, L, D = 2, 8, 32
    key = jax.random.PRNGKey(0)
    k1, k2, k3, k4, k5, k6 = jax.random.split(key, 6)

    hidden = jax.random.normal(k1, (B, L, D), dtype=jnp.float32)
    resid = jax.random.normal(k2, (B, L, D), dtype=jnp.float32)

    # LayerNorm params (torch init: weight=1, bias=0; perturb deterministically)
    gamma = jnp.ones((D,), jnp.float32) + 0.01 * jax.random.normal(k3, (D,))
    beta = 0.01 * jax.random.normal(k4, (D,))

    # mixer (linear) params; w_t is W^T so out = y @ w_t + b
    w_t = jax.random.normal(k5, (D, D), dtype=jnp.float32) / jnp.sqrt(D)
    b = 0.01 * jax.random.normal(k6, (D,))

    # 1) residual provided, f32 activations
    out, res = block_forward(hidden, resid, gamma, beta, w_t, b)
    jax.block_until_ready((out, res))
    ref_out, ref_res = _reference(hidden, resid, gamma, beta, w_t, b)
    # out tolerance relaxed: matmul operands are bf16 (MXU), accumulate f32.
    assert jnp.allclose(out, ref_out, atol=2e-2, rtol=2e-2)
    assert jnp.allclose(res, ref_res, atol=1e-5, rtol=1e-5)

    # 2) residual=None (first block) -> dedicated kernel, no zero-residual DMA
    out0, res0 = block_forward(hidden, None, gamma, beta, w_t, b)
    jax.block_until_ready((out0, res0))
    ref_out0, ref_res0 = _reference(hidden, None, gamma, beta, w_t, b)
    assert jnp.allclose(out0, ref_out0, atol=2e-2, rtol=2e-2)
    assert jnp.allclose(res0, ref_res0, atol=1e-5, rtol=1e-5)

    # 3) bf16 activations streamed natively; mixer output emitted in bf16,
    #    residual still in fp32 (residual_in_fp32 semantics).
    hidden_bf = hidden.astype(jnp.bfloat16)
    resid_bf = resid.astype(jnp.bfloat16)
    out_bf, res_bf = block_forward(hidden_bf, resid_bf, gamma, beta, w_t, b)
    jax.block_until_ready((out_bf, res_bf))
    ref_out_bf, ref_res_bf = _reference(hidden_bf, resid_bf, gamma, beta, w_t, b)
    assert out_bf.dtype == jnp.bfloat16 and res_bf.dtype == jnp.float32
    assert jnp.allclose(out_bf.astype(jnp.float32), ref_out_bf,
                        atol=5e-2, rtol=5e-2)
    assert jnp.allclose(res_bf, ref_res_bf, atol=1e-5, rtol=1e-5)

    print("KERNEL_OK")
</pallas_src>

<mosaic_0001>
module attributes {stable_mosaic.version = 11 : i64} {
  func.func @_probe(%arg0: i32, %arg1: memref<8x128xf32, #tpu.memory_space<vmem>>, %arg2: memref<8x128xf32, #tpu.memory_space<vmem>>) attributes {dimension_semantics = [#tpu.dimension_semantics<arbitrary>], iteration_bounds = array<i64: 1>, scalar_prefetch = 0 : i64, scratch_operands = 0 : i64, tpu.core_type = #tpu.core_type<tc>, window_params = [{pipeline_mode = #tpu.pipeline_mode<synchronous>, transform_indices = @transform_0, window_bounds = array<i64: 8, 128>}, {pipeline_mode = #tpu.pipeline_mode<synchronous>, transform_indices = @transform_1, window_bounds = array<i64: 8, 128>}]} {
    %c0 = arith.constant 0 : index
    %c0_0 = arith.constant 0 : index
    %0 = vector.load %arg1[%c0, %c0_0] : memref<8x128xf32, #tpu.memory_space<vmem>>, vector<8x128xf32>
    %c0_1 = arith.constant 0 : index
    %c0_2 = arith.constant 0 : index
    %1 = vector.load %arg2[%c0_1, %c0_2] : memref<8x128xf32, #tpu.memory_space<vmem>>, vector<8x128xf32>
    tpu.vector_store %arg2[%c0_1, %c0_2], %0 {strides = array<i32>} : memref<8x128xf32, #tpu.memory_space<vmem>>, vector<8x128xf32>,
    return
  }
  func.func @transform_0(%arg0: i32) -> (i32, i32) {
    %c0_i32 = arith.constant 0 : i32
    %c0_i32_0 = arith.constant 0 : i32
    %c0_i32_1 = arith.constant 0 : i32
    return %c0_i32, %c0_i32_0 : i32, i32
  }
  func.func @transform_1(%arg0: i32) -> (i32, i32) {
    %c0_i32 = arith.constant 0 : i32
    %c0_i32_0 = arith.constant 0 : i32
    %c0_i32_1 = arith.constant 0 : i32
    return %c0_i32, %c0_i32_0 : i32, i32
  }
}

module attributes {stable_mosaic.version = 11 : i64} {
  func.func @_block_kernel_add(%arg0: i32, %arg1: i32, %arg2: memref<8x128xf32, #tpu.memory_space<vmem>>, %arg3: memref<8x128xf32, #tpu.memory_space<vmem>>, %arg4: memref<1x128xf32, #tpu.memory_space<vmem>>, %arg5: memref<1x128xf32, #tpu.memory_space<vmem>>, %arg6: memref<128x128xbf16, #tpu.memory_space<vmem>>, %arg7: memref<1x128xf32, #tpu.memory_space<vmem>>, %arg8: memref<8x128xf32, #tpu.memory_space<vmem>>, %arg9: memref<8x128xf32, #tpu.memory_space<vmem>>) attributes {dimension_semantics = [#tpu.dimension_semantics<parallel>, #tpu.dimension_semantics<arbitrary>], iteration_bounds = array<i64: 2, 1>, scalar_prefetch = 0 : i64, scratch_operands = 0 : i64, tpu.core_type = #tpu.core_type<tc>, window_params = [{transform_indices = @transform_0, window_bounds = array<i64: 8, 128>}, {transform_indices = @transform_1, window_bounds = array<i64: 8, 128>}, {pipeline_mode = #tpu.pipeline_mode<synchronous>, transform_indices = @transform_2, window_bounds = array<i64: 1, 128>}, {pipeline_mode = #tpu.pipeline_mode<synchronous>, transform_indices = @transform_3, window_bounds = array<i64: 1, 128>}, {transform_indices = @transform_4, window_bounds = array<i64: 128, 128>}, {transform_indices = @transform_5, window_bounds = array<i64: 1, 128>}, {transform_indices = @transform_6, window_bounds = array<i64: 8, 128>}, {transform_indices = @transform_7, window_bounds = array<i64: 8, 128>}]} {
    %c0 = arith.constant 0 : index
    %c0_0 = arith.constant 0 : index
    %0 = vector.load %arg3[%c0, %c0_0] : memref<8x128xf32, #tpu.memory_space<vmem>>, vector<8x128xf32>
    %c0_1 = arith.constant 0 : index
    %c0_2 = arith.constant 0 : index
    %1 = vector.load %arg2[%c0_1, %c0_2] : memref<8x128xf32, #tpu.memory_space<vmem>>, vector<8x128xf32>
    %2 = arith.addf %0, %1 : vector<8x128xf32>
    %c0_i32 = arith.constant 0 : i32
    %3 = arith.cmpi eq, %arg1, %c0_i32 : i32
    %4 = arith.extui %3 : i1 to i32
    %c0_i32_3 = arith.constant 0 : i32
    %5 = arith.cmpi ne, %4, %c0_i32_3 : i32
    scf.if %5 {
      %c0_19 = arith.constant 0 : index
      %c0_20 = arith.constant 0 : index
      %42 = vector.load %arg9[%c0_19, %c0_20] : memref<8x128xf32, #tpu.memory_space<vmem>>, vector<8x128xf32>
      tpu.vector_store %arg9[%c0_19, %c0_20], %2 {strides = array<i32>} : memref<8x128xf32, #tpu.memory_space<vmem>>, vector<8x128xf32>,
    } else {
    }
    %cst = arith.constant dense<0.000000e+00> : vector<8xf32>
    %6 = vector.multi_reduction <add>, %2, %cst [1] : vector<8x128xf32> to vector<8xf32>
    %7 = vector.shape_cast %6 : vector<8xf32> to vector<8x1xf32>
    %cst_4 = arith.constant 3.125000e-02 : f32
    %8 = vector.broadcast %cst_4 : f32 to vector<8x1xf32>
    %9 = arith.mulf %7, %8 : vector<8x1xf32>
    %10 = vector.broadcast %9 : vector<8x1xf32> to vector<8x128xf32>
    %11 = arith.subf %2, %10 : vector<8x128xf32>
    %12 = tpu.iota {dimensions = array<i32: 1>} : vector<1x128xi32>
    %c32_i32 = arith.constant 32 : i32
    %13 = vector.broadcast %c32_i32 : i32 to vector<1x128xi32>
    %14 = arith.cmpi slt, %12, %13 : vector<1x128xi32>
    %15 = arith.extui %14 : vector<1x128xi1> to vector<1x128xi32>
    %16 = arith.sitofp %15 : vector<1x128xi32> to vector<1x128xf32>
    %17 = vector.broadcast %16 : vector<1x128xf32> to vector<8x128xf32>
    %18 = arith.mulf %11, %17 : vector<8x128xf32>
    %19 = arith.mulf %18, %18 : vector<8x128xf32>
    %cst_5 = arith.constant dense<0.000000e+00> : vector<8xf32>
    %20 = vector.multi_reduction <add>, %19, %cst_5 [1] : vector<8x128xf32> to vector<8xf32>
    %21 = vector.shape_cast %20 : vector<8xf32> to vector<8x1xf32>
    %cst_6 = arith.constant 3.125000e-02 : f32
    %22 = vector.broadcast %cst_6 : f32 to vector<8x1xf32>
    %23 = arith.mulf %21, %22 : vector<8x1xf32>
    %cst_7 = arith.constant 9.99999974E-6 : f32
    %24 = vector.broadcast %cst_7 : f32 to vector<8x1xf32>
    %25 = arith.addf %23, %24 : vector<8x1xf32>
    %26 = math.rsqrt %25 : vector<8x1xf32>
    %27 = vector.broadcast %26 : vector<8x1xf32> to vector<8x128xf32>
    %28 = arith.mulf %11, %27 : vector<8x128xf32>
    %c0_8 = arith.constant 0 : index
    %c0_9 = arith.constant 0 : index
    %29 = vector.load %arg4[%c0_8, %c0_9] : memref<1x128xf32, #tpu.memory_space<vmem>>, vector<1x128xf32>
    %30 = vector.broadcast %29 : vector<1x128xf32> to vector<8x128xf32>
    %31 = arith.mulf %28, %30 : vector<8x128xf32>
    %c0_10 = arith.constant 0 : index
    %c0_11 = arith.constant 0 : index
    %32 = vector.load %arg5[%c0_10, %c0_11] : memref<1x128xf32, #tpu.memory_space<vmem>>, vector<1x128xf32>
    %33 = vector.broadcast %32 : vector<1x128xf32> to vector<8x128xf32>
    %34 = arith.addf %31, %33 : vector<8x128xf32>
    %35 = arith.truncf %34 : vector<8x128xf32> to vector<8x128xbf16>
    %c0_12 = arith.constant 0 : index
    %c0_13 = arith.constant 0 : index
    %36 = vector.load %arg6[%c0_12, %c0_13] : memref<128x128xbf16, #tpu.memory_space<vmem>>, vector<128x128xbf16>
    %cst_14 = arith.constant dense<0.000000e+00> : vector<8x128xf32>
    %37 = tpu.matmul %35, %36, %cst_14 {dimension_numbers = #tpu.dot_dimension_numbers<[1], [0], [0], [1], [0, 0, 1, 1], [], []>} : vector<8x128xbf16>, vector<128x128xbf16>, vector<8x128xf32> -> vector<8x128xf32>
    %c0_15 = arith.constant 0 : index
    %c0_16 = arith.constant 0 : index
    %38 = vector.load %arg7[%c0_15, %c0_16] : memref<1x128xf32, #tpu.memory_space<vmem>>, vector<1x128xf32>
    %39 = vector.broadcast %38 : vector<1x128xf32> to vector<8x128xf32>
    %40 = arith.addf %37, %39 : vector<8x128xf32>
    %c0_17 = arith.constant 0 : index
    %c0_18 = arith.constant 0 : index
    %41 = vector.load %arg8[%c0_17, %c0_18] : memref<8x128xf32, #tpu.memory_space<vmem>>, vector<8x128xf32>
    tpu.vector_store %arg8[%c0_17, %c0_18], %40 {strides = array<i32>} : memref<8x128xf32, #tpu.memory_space<vmem>>, vector<8x128xf32>,
    return
  }
  func.func @transform_0(%arg0: i32, %arg1: i32) -> (i32, i32) {
    %c0_i32 = arith.constant 0 : i32
    %c0_i32_0 = arith.constant 0 : i32
    return %arg0, %c0_i32 : i32, i32
  }
  func.func @transform_1(%arg0: i32, %arg1: i32) -> (i32, i32) {
    %c0_i32 = arith.constant 0 : i32
    %c0_i32_0 = arith.constant 0 : i32
    return %arg0, %c0_i32 : i32, i32
  }
  func.func @transform_2(%arg0: i32, %arg1: i32) -> (i32, i32) {
    %c0_i32 = arith.constant 0 : i32
    %c0_i32_0 = arith.constant 0 : i32
    %c0_i32_1 = arith.constant 0 : i32
    return %c0_i32, %c0_i32_0 : i32, i32
  }
  func.func @transform_3(%arg0: i32, %arg1: i32) -> (i32, i32) {
    %c0_i32 = arith.constant 0 : i32
    %c0_i32_0 = arith.constant 0 : i32
    %c0_i32_1 = arith.constant 0 : i32
    return %c0_i32, %c0_i32_0 : i32, i32
  }
  func.func @transform_4(%arg0: i32, %arg1: i32) -> (i32, i32) {
    %c0_i32 = arith.constant 0 : i32
    %c0_i32_0 = arith.constant 0 : i32
    return %c0_i32, %arg1 : i32, i32
  }
  func.func @transform_5(%arg0: i32, %arg1: i32) -> (i32, i32) {
    %c0_i32 = arith.constant 0 : i32
    %c0_i32_0 = arith.constant 0 : i32
    return %c0_i32, %arg1 : i32, i32
  }
  func.func @transform_6(%arg0: i32, %arg1: i32) -> (i32, i32) {
    %c0_i32 = arith.constant 0 : i32
    return %arg0, %arg1 : i32, i32
  }
  func.func @transform_7(%arg0: i32, %arg1: i32) -> (i32, i32) {
    %c0_i32 = arith.constant 0 : i32
    %c0_i32_0 = arith.constant 0 : i32
    return %arg0, %c0_i32 : i32, i32
  }
}

</mosaic_0001>

<llo_original>
// kernel: tpu_custom_call.1
$region0: #{tpu_custom_call.1}
  #allocation0 [shape = 'u32[]', space=smem, size = 0x4, offset = 0x4, fixed_abs, tag = 'smem constant byte address 0x4 - core index']
  #allocation1 [shape = 'u32[144,128]{1,0:T(1,128)}', space=vmem, size = 0x12000, scoped, tag = 'internal scratch']
  %s0 = inlined_call_operand.hbm [shape: f32[8,128], index: 0, kind: input, shape index: {}]
  %s1 = inlined_call_operand.hbm [shape: f32[8,128], index: 1, kind: output, shape index: {}]
  %s2 = sld [smem:[#allocation0]]
  $region18: #{tpu_custom_call.1} parent=0
    _
  %s4 = ssub.s32 1, %s2
  %s5 = scalar_select 0, %s4, %s2
  $region1: #{tpu_custom_call.1} parent=0
    #allocation2 [shape = 'u8[4096]{0}', space=vmem, size = 0x1000, scoped, tag = 'input window, operand 0, single buffered']
    #allocation3 [shape = 's32[1]{0}', space=sflag, size = 0x4, scoped, tag = 'scoped memory for tpu_custom_call.1']
    #allocation4 [shape = 's32[1]{0}', space=sflag, size = 0x4, scoped, tag = 'scoped memory for tpu_custom_call.1']
    #allocation5 [shape = 'u8[4096]{0}', space=vmem, size = 0x1000, scoped, tag = 'output window, operand 0, single buffered']
    %6 = vsyncpa [#allocation3], 0
    %7 = vsyncpa [#allocation4], 0
    // Predicated region
    $region2: #{tpu_custom_call.1} parent=1 // pred_check
      _
    $region3: #{tpu_custom_call.1} parent=1 // pred_check_branch
      %9 = sbr.rel (0) target = $region5
    $region4: #{tpu_custom_call.1} parent=1 // pred_region
      %s11 = ssub.s32 128, 128
      %12 = vsyncadd [#allocation3], %s11
      %s14 = sshll.u32 [#allocation2], 4
      %s15 = int_to_ptr.vmem [resolvable:$true] %s14
      %17 = dma.hbm_to_vmem [thread:$0]  %s0, 128, %s15, [#allocation3]
    $region5: #{tpu_custom_call.1} parent=1 // pred_fallthru
      _
    // Predicated region
    $region6: #{tpu_custom_call.1} parent=1 // pred_check
      _
    $region7: #{tpu_custom_call.1} parent=1 // pred_check_branch
      %19 = sbr.rel (0) target = $region9
    $region8: #{tpu_custom_call.1} parent=1 // pred_region
      %20 = dma.done [#allocation3], 128
    $region9: #{tpu_custom_call.1} parent=1 // pred_fallthru
      _
    %v21 = vld [vmem:[#allocation2] sm:$0xff]
    %22 = vst [vmem:[#allocation5] sm:$0xff] %v21
    // Predicated region
    $region10: #{tpu_custom_call.1} parent=1 // pred_check
      _
    $region11: #{tpu_custom_call.1} parent=1 // pred_check_branch
      %24 = sbr.rel (0) target = $region13
    $region12: #{tpu_custom_call.1} parent=1 // pred_region
      %s26 = ssub.s32 128, 128
      %27 = vsyncadd [#allocation4], %s26
      %s29 = sshll.u32 [#allocation5], 4
      %s30 = int_to_ptr.vmem [resolvable:$true] %s29
      %32 = dma.vmem_to_hbm [thread:$0]  %s30, 128, %s1, [#allocation4]
    $region13: #{tpu_custom_call.1} parent=1 // pred_fallthru
      _
    // Predicated region
    $region14: #{tpu_custom_call.1} parent=1 // pred_check
      _
    $region15: #{tpu_custom_call.1} parent=1 // pred_check_branch
      %34 = sbr.rel (0) target = $region17
    $region16: #{tpu_custom_call.1} parent=1 // pred_region
      %35 = dma.done [#allocation4], 128
    $region17: #{tpu_custom_call.1} parent=1 // pred_fallthru
      _
    %36 = vsyncpa [#allocation3], 1
    %37 = vsyncpa [#allocation4], 1

// kernel: tpu_custom_call.1
$region0: #{tpu_custom_call.1}
  #allocation0 [shape = 'u32[]', space=smem, size = 0x4, offset = 0x4, fixed_abs, tag = 'smem constant byte address 0x4 - core index']
  #allocation1 [shape = 'u32[144,128]{1,0:T(1,128)}', space=vmem, size = 0x12000, scoped, tag = 'internal scratch']
  %s0 = inlined_call_operand.hbm [shape: f32[16,128], index: 0, kind: input, shape index: {}]
  %s1 = inlined_call_operand.hbm [shape: f32[16,128], index: 1, kind: input, shape index: {}]
  %s2 = inlined_call_operand.vmem [shape: f32[1,128], index: 2, kind: input, shape index: {}]
  %s3 = inlined_call_operand.vmem [shape: f32[1,128], index: 3, kind: input, shape index: {}]
  %s4 = inlined_call_operand.hbm [shape: bf16[128,128], index: 4, kind: input, shape index: {}]
  %s5 = inlined_call_operand.vmem [shape: f32[1,128], index: 5, kind: input, shape index: {}]
  %s6 = inlined_call_operand.hbm [shape: f32[16,128], index: 6, kind: output, shape index: {0}]
  %s7 = inlined_call_operand.hbm [shape: f32[16,128], index: 7, kind: output, shape index: {1}]
  %8 = xla_tuple %s6, %s7
  %s9 = sld [smem:[#allocation0]]
  $region81: #{tpu_custom_call.1} parent=0
    _
  %s11 = ssub.s32 1, %s9
  %s12 = scalar_select 0, %s11, %s9
  $region1: #{tpu_custom_call.1} parent=0
    #allocation2 [shape = 'u8[8192]{0}', space=vmem, size = 0x2000, scoped, tag = 'input window, operand 0']
    #allocation3 [shape = 's32[2]{0}', space=sflag, size = 0x8, scoped, tag = 'scoped memory for tpu_custom_call.1']
    #allocation4 [shape = 's32[2]{0}', space=sflag, size = 0x8, scoped, tag = 'scoped memory for tpu_custom_call.1']
    #allocation5 [shape = 'u8[8192]{0}', space=vmem, size = 0x2000, scoped, tag = 'input window, operand 1']
    #allocation6 [shape = 's32[2]{0}', space=sflag, size = 0x8, scoped, tag = 'scoped memory for tpu_custom_call.1']
    #allocation7 [shape = 'u8[32768]{0}', space=vmem, size = 0x8000, scoped, tag = 'input window, operand 4, single buffered']
    #allocation8 [shape = 'u8[8192]{0}', space=vmem, size = 0x2000, scoped, tag = 'output window, operand 0']
    #allocation9 [shape = 'u8[8192]{0}', space=vmem, size = 0x2000, scoped, tag = 'output window, operand 1']
    #allocation10 [shape = 's32[2]{0}', space=sflag, size = 0x8, scoped, tag = 'scoped memory for tpu_custom_call.1']
    %13 = vsyncpa [#allocation3], 0
    %s14 = scalar_lea.sflag [#allocation3], 1
    %15 = vsyncpa %s14, 0
    %16 = vsyncpa [#allocation6], 0
    %s17 = scalar_lea.sflag [#allocation6], 1
    %18 = vsyncpa %s17, 0
    %19 = vsyncpa [#allocation4], 0
    %s20 = scalar_lea.sflag [#allocation4], 1
    %21 = vsyncpa %s20, 0
    %22 = vsyncpa [#allocation10], 0
    %s23 = scalar_lea.sflag [#allocation10], 1
    %24 = vsyncpa %s23, 0
    loop: start=0, step=1, limit=4
    $region2: #{tpu_custom_call.1} parent=1 // loop_pre_header
      _
    $region3: #{tpu_custom_call.1} parent=1 // loop_header
      %s26 = sphi 0, %s30
      %p27 = scmp.ge.s32.totalorder %s26, 4
      %s33 = sphi 0, %s45
      %s34 = sphi 0, %s41
      %s35 = sphi 0, %s33
      %s36 = sphi 0, %s34
      %s37 = sphi 0, %s35
      %s38 = sphi 0, %s36
      %s48 = sphi 0, %s50
      %s51 = sphi 0, %s48
      %s52 = sphi 0, %s51
      %s68 = sphi 0, %s52
      %s74 = sphi 0, %s76
      %s77 = sphi 0, %s74
      %s78 = sphi 0, %s77
      %s94 = sphi 0, %s78
      %s98 = sphi 0, %s98
      %s100 = sphi 0, %s98
      %s101 = sphi 0, %s100
      %s115 = sphi 0, %s101
      %s119 = sphi 0, %s119
      %s121 = sphi 0, %s119
      %s122 = sphi 0, %s121
      %s136 = sphi 0, %s122
      %s142 = sphi 0, %s144
      %s145 = sphi 0, %s142
      %s146 = sphi 0, %s145
      %s162 = sphi 0, %s146
      %s168 = sphi 0, %s170
      %s171 = sphi 0, %s168
      %s172 = sphi 0, %s171
      %s188 = sphi 0, %s172
      %s196 = sphi 0, %s198
      %s199 = sphi 0, %s196
      %s200 = sphi 0, %s199
      %s216 = sphi 0, %s200
      %s222 = sphi 0, %s224
      %s225 = sphi 0, %s222
      %s226 = sphi 0, %s225
      %s242 = sphi 0, %s226
    $region4: #{tpu_custom_call.1} parent=1 // loop_header_branch
      %29 = sbr.rel (%p27) target = $region8
    $region5: #{tpu_custom_call.1} parent=1 // loop_body
      %s31 = ssub.s32 %s26, 1
      %s32 = ssub.s32 %s26, 2
      %s39 = sadd.s32 1, %s34
      %p40 = scmp.ge.s32.totalorder %s39, 1
      %s41 = scalar_select %p40, 0, %s39
      %s42 = sadd.s32 1, %s33
      %s43 = scalar_select %p40, %s42, %s33
      %p44 = scmp.ge.s32.totalorder %s43, 2
      %s45 = scalar_select %p44, 0, %s43
      %s46 = ssub.s32 %s33, %s45
      %p47 = scmp.eq.s32.totalorder %s46, 0
      %s49 = sadd.s32 %s48, 1
      %s50 = scalar_select %p47, %s48, %s49
      %p53 = pneg %p47
      %p54 = scmp.eq.s32.totalorder %s26, 1
      %p55 = por %p53, %p54
      %p56 = scmp.ne.s32.totalorder %s48, %s51
      %p57 = scmp.eq.s32.totalorder %s26, 0
      %p58 = por %p56, %p57
      %p59 = scmp.ne.s32.totalorder %s48, %s51
      %p60 = scmp.eq.s32.totalorder %s31, 1
      %p61 = por %p59, %p60
      %p62 = scmp.ne.s32.totalorder %s51, %s52
      %p63 = scmp.eq.s32.totalorder %s31, 0
      %p64 = por %p62, %p63
      %p65 = scmp.ne.s32.totalorder %s51, %s52
      %p66 = scmp.eq.s32.totalorder %s32, 1
      %p67 = por %p65, %p66
      %p69 = scmp.ne.s32.totalorder %s52, %s68
      %p70 = scmp.eq.s32.totalorder %s32, 0
      %p71 = por %p69, %p70
      %s72 = ssub.s32 %s33, %s45
      %p73 = scmp.eq.s32.totalorder %s72, 0
      %s75 = sadd.s32 %s74, 1
      %s76 = scalar_select %p73, %s74, %s75
      %p79 = pneg %p73
      %p80 = scmp.eq.s32.totalorder %s26, 1
      %p81 = por %p79, %p80
      %p82 = scmp.ne.s32.totalorder %s74, %s77
      %p83 = scmp.eq.s32.totalorder %s26, 0
      %p84 = por %p82, %p83
      %p85 = scmp.ne.s32.totalorder %s74, %s77
      %p86 = scmp.eq.s32.totalorder %s31, 1
      %p87 = por %p85, %p86
      %p88 = scmp.ne.s32.totalorder %s77, %s78
      %p89 = scmp.eq.s32.totalorder %s31, 0
      %p90 = por %p88, %p89
      %p91 = scmp.ne.s32.totalorder %s77, %s78
      %p92 = scmp.eq.s32.totalorder %s32, 1
      %p93 = por %p91, %p92
      %p95 = scmp.ne.s32.totalorder %s78, %s94
      %p96 = scmp.eq.s32.totalorder %s32, 0
      %p97 = por %p95, %p96
      %s99 = sadd.s32 %s98, 1
      %p102 = scmp.eq.s32.totalorder %s26, 1
      %p103 = scmp.ne.s32.totalorder %s98, %s100
      %p104 = scmp.eq.s32.totalorder %s26, 0
      %p105 = por %p103, %p104
      %p106 = scmp.ne.s32.totalorder %s98, %s100
      %p107 = scmp.eq.s32.totalorder %s31, 1
      %p108 = por %p106, %p107
      %p109 = scmp.ne.s32.totalorder %s100, %s101
      %p110 = scmp.eq.s32.totalorder %s31, 0
      %p111 = por %p109, %p110
      %p112 = scmp.ne.s32.totalorder %s100, %s101
      %p113 = scmp.eq.s32.totalorder %s32, 1
      %p114 = por %p112, %p113
      %p116 = scmp.ne.s32.totalorder %s101, %s115
      %p117 = scmp.eq.s32.totalorder %s32, 0
      %p118 = por %p116, %p117
      %s120 = sadd.s32 %s119, 1
      %p123 = scmp.eq.s32.totalorder %s26, 1
      %p124 = scmp.ne.s32.totalorder %s119, %s121
      %p125 = scmp.eq.s32.totalorder %s26, 0
      %p126 = por %p124, %p125
      %p127 = scmp.ne.s32.totalorder %s119, %s121
      %p128 = scmp.eq.s32.totalorder %s31, 1
      %p129 = por %p127, %p128
      %p130 = scmp.ne.s32.totalorder %s121, %s122
      %p131 = scmp.eq.s32.totalorder %s31, 0
      %p132 = por %p130, %p131
      %p133 = scmp.ne.s32.totalorder %s121, %s122
      %p134 = scmp.eq.s32.totalorder %s32, 1
      %p135 = por %p133, %p134
      %p137 = scmp.ne.s32.totalorder %s122, %s136
      %p138 = scmp.eq.s32.totalorder %s32, 0
      %p139 = por %p137, %p138
      %s140 = ssub.s32 %s34, %s41
      %p141 = scmp.eq.s32.totalorder %s140, 0
      %s143 = sadd.s32 %s142, 1
      %s144 = scalar_select %p141, %s142, %s143
      %p147 = pneg %p141
      %p148 = scmp.eq.s32.totalorder %s26, 1
      %p149 = por %p147, %p148
      %p150 = scmp.ne.s32.totalorder %s142, %s145
      %p151 = scmp.eq.s32.totalorder %s26, 0
      %p152 = por %p150, %p151
      %p153 = scmp.ne.s32.totalorder %s142, %s145
      %p154 = scmp.eq.s32.totalorder %s31, 1
      %p155 = por %p153, %p154
      %p156 = scmp.ne.s32.totalorder %s145, %s146
      %p157 = scmp.eq.s32.totalorder %s31, 0
      %p158 = por %p156, %p157
      %p159 = scmp.ne.s32.totalorder %s145, %s146
      %p160 = scmp.eq.s32.totalorder %s32, 1
      %p161 = por %p159, %p160
      %p163 = scmp.ne.s32.totalorder %s146, %s162
      %p164 = scmp.eq.s32.totalorder %s32, 0
      %p165 = por %p163, %p164
      %s166 = ssub.s32 %s34, %s41
      %p167 = scmp.eq.s32.totalorder %s166, 0
      %s169 = sadd.s32 %s168, 1
      %s170 = scalar_select %p167, %s168, %s169
      %p173 = pneg %p167
      %p174 = scmp.eq.s32.totalorder %s26, 1
      %p175 = por %p173, %p174
      %p176 = scmp.ne.s32.totalorder %s168, %s171
      %p177 = scmp.eq.s32.totalorder %s26, 0
      %p178 = por %p176, %p177
      %p179 = scmp.ne.s32.totalorder %s168, %s171
      %p180 = scmp.eq.s32.totalorder %s31, 1
      %p181 = por %p179, %p180
      %p182 = scmp.ne.s32.totalorder %s171, %s172
      %p183 = scmp.eq.s32.totalorder %s31, 0
      %p184 = por %p182, %p183
      %p185 = scmp.ne.s32.totalorder %s171, %s172
      %p186 = scmp.eq.s32.totalorder %s32, 1
      %p187 = por %p185, %p186
      %p189 = scmp.ne.s32.totalorder %s172, %s188
      %p190 = scmp.eq.s32.totalorder %s32, 0
      %p191 = por %p189, %p190
      %s192 = ssub.s32 %s33, %s45
      %s193 = ssub.s32 %s34, %s41
      %s194 = sor.u32 %s192, %s193
      %p195 = scmp.eq.s32.totalorder %s194, 0
      %s197 = sadd.s32 %s196, 1
      %s198 = scalar_select %p195, %s196, %s197
      %p201 = pneg %p195
      %p202 = scmp.eq.s32.totalorder %s26, 1
      %p203 = por %p201, %p202
      %p204 = scmp.ne.s32.totalorder %s196, %s199
      %p205 = scmp.eq.s32.totalorder %s26, 0
      %p206 = por %p204, %p205
      %p207 = scmp.ne.s32.totalorder %s196, %s199
      %p208 = scmp.eq.s32.totalorder %s31, 1
      %p209 = por %p207, %p208
      %p210 = scmp.ne.s32.totalorder %s199, %s200
      %p211 = scmp.eq.s32.totalorder %s31, 0
      %p212 = por %p210, %p211
      %p213 = scmp.ne.s32.totalorder %s199, %s200
      %p214 = scmp.eq.s32.totalorder %s32, 1
      %p215 = por %p213, %p214
      %p217 = scmp.ne.s32.totalorder %s200, %s216
      %p218 = scmp.eq.s32.totalorder %s32, 0
      %p219 = por %p217, %p218
      %s220 = ssub.s32 %s33, %s45
      %p221 = scmp.eq.s32.totalorder %s220, 0
      %s223 = sadd.s32 %s222, 1
      %s224 = scalar_select %p221, %s222, %s223
      %p227 = pneg %p221
      %p228 = scmp.eq.s32.totalorder %s26, 1
      %p229 = por %p227, %p228
      %p230 = scmp.ne.s32.totalorder %s222, %s225
      %p231 = scmp.eq.s32.totalorder %s26, 0
      %p232 = por %p230, %p231
      %p233 = scmp.ne.s32.totalorder %s222, %s225
      %p234 = scmp.eq.s32.totalorder %s31, 1
      %p235 = por %p233, %p234
      %p236 = scmp.ne.s32.totalorder %s225, %s226
      %p237 = scmp.eq.s32.totalorder %s31, 0
      %p238 = por %p236, %p237
      %p239 = scmp.ne.s32.totalorder %s225, %s226
      %p240 = scmp.eq.s32.totalorder %s32, 1
      %p241 = por %p239, %p240
      %p243 = scmp.ne.s32.totalorder %s226, %s242
      %p244 = scmp.eq.s32.totalorder %s32, 0
      %p245 = por %p243, %p244
      %p246 = scmp.le.s32.totalorder 1, %s26
      %p247 = scmp.lt.s32.totalorder %s26, 3
      %p248 = pnand %p246, %p247
      %p249 = pneg %p248
      // Predicated region
      $region9: #{tpu_custom_call.1} parent=5 // pred_check
        _
      $region10: #{tpu_custom_call.1} parent=5 // pred_check_branch
        %251 = sbr.rel (%p248) target = $region12
      $region11: #{tpu_custom_call.1} parent=5 // pred_region
        %s252 = ssub.s32 %s26, 1
        // Predicated region
        $region13: #{tpu_custom_call.1} parent=11 // pred_check
          %p253 = pneg %p111
        $region14: #{tpu_custom_call.1} parent=11 // pred_check_branch
          %255 = sbr.rel (%p253) target = $region16
        $region15: #{tpu_custom_call.1} parent=11 // pred_region
          _
        $region16: #{tpu_custom_call.1} parent=11 // pred_fallthru
          _
        // Predicated region
        $region17: #{tpu_custom_call.1} parent=11 // pred_check
          %p256 = pneg %p132
        $region18: #{tpu_custom_call.1} parent=11 // pred_check_branch
          %258 = sbr.rel (%p256) target = $region20
        $region19: #{tpu_custom_call.1} parent=11 // pred_region
          _
        $region20: #{tpu_custom_call.1} parent=11 // pred_fallthru
          _
        // Predicated region
        $region21: #{tpu_custom_call.1} parent=11 // pred_check
          %p259 = pneg %p158
        $region22: #{tpu_custom_call.1} parent=11 // pred_check_branch
          %261 = sbr.rel (%p259) target = $region24
        $region23: #{tpu_custom_call.1} parent=11 // pred_region
          %s263 = ssub.s32 1024, 1024
          %264 = vsyncadd [#allocation6], %s263
          %s265 = smul.addr %s36, 64
          %s266 = scalar_lea.hbm %s4, %s265
          %s267 = sshll.u32 [#allocation7], 4
          %s268 = int_to_ptr.vmem [resolvable:$true] %s267
          %273 = dma.hbm_to_vmem [thread:$0]  %s266, 1024, %s268, [#allocation6], 64, 64, 4
        $region24: #{tpu_custom_call.1} parent=11 // pred_fallthru
          _
        // Predicated region
        $region25: #{tpu_custom_call.1} parent=11 // pred_check
          %p274 = pneg %p184
        $region26: #{tpu_custom_call.1} parent=11 // pred_check_branch
          %276 = sbr.rel (%p274) target = $region28
        $region27: #{tpu_custom_call.1} parent=11 // pred_region
          %p277 = scmp.lt.s32.totalorder %s36, 0
          %s278 = scalar_select %p277, %s36, 0
          %s279 = scalar_lea.vmem %s5, %s278
        $region28: #{tpu_custom_call.1} parent=11 // pred_fallthru
          _
      $region12: #{tpu_custom_call.1} parent=5 // pred_fallthru
        _
      %p280 = scmp.lt.s32.totalorder %s26, 2
      // Predicated region
      $region29: #{tpu_custom_call.1} parent=5 // pred_check
        %p281 = pneg %p280
      $region30: #{tpu_custom_call.1} parent=5 // pred_check_branch
        %283 = sbr.rel (%p281) target = $region32
      $region31: #{tpu_custom_call.1} parent=5 // pred_region
        // Predicated region
        $region33: #{tpu_custom_call.1} parent=31 // pred_check
          %p284 = pneg %p58
        $region34: #{tpu_custom_call.1} parent=31 // pred_check_branch
          %286 = sbr.rel (%p284) target = $region36
        $region35: #{tpu_custom_call.1} parent=31 // pred_region
          %s287 = sand.u32 %s48, 1
          %s288 = scalar_lea.sflag [#allocation3], %s287
          %s289 = sand.u32 %s48, 1
          %s290 = smul.addr %s289, 8
          %s291 = scalar_lea.vmem [#allocation2], %s290
          %s293 = ssub.s32 128, 128
          %294 = vsyncadd %s288, %s293
          %s295 = smul.addr %s33, 128
          %s296 = scalar_lea.hbm %s0, %s295
          %s298 = sshll.u32 %s291, 4
          %s299 = int_to_ptr.vmem [resolvable:$true] %s298
          %301 = dma.hbm_to_vmem [thread:$0]  %s296, 128, %s299, %s288
        $region36: #{tpu_custom_call.1} parent=31 // pred_fallthru
          _
        // Predicated region
        $region37: #{tpu_custom_call.1} parent=31 // pred_check
          %p302 = pneg %p84
        $region38: #{tpu_custom_call.1} parent=31 // pred_check_branch
          %304 = sbr.rel (%p302) target = $region40
        $region39: #{tpu_custom_call.1} parent=31 // pred_region
          %s305 = sand.u32 %s26, 1
          %s306 = scalar_lea.sflag [#allocation6], %s305
          %s307 = sand.u32 %s74, 1
          %s308 = smul.addr %s307, 8
          %s309 = scalar_lea.vmem [#allocation5], %s308
          %s311 = ssub.s32 128, 128
          %312 = vsyncadd %s306, %s311
          %s313 = smul.addr %s33, 128
          %s314 = scalar_lea.hbm %s1, %s313
          %s316 = sshll.u32 %s309, 4
          %s317 = int_to_ptr.vmem [resolvable:$true] %s316
          %319 = dma.hbm_to_vmem [thread:$0]  %s314, 128, %s317, %s306
        $region40: #{tpu_custom_call.1} parent=31 // pred_fallthru
          _
      $region32: #{tpu_custom_call.1} parent=5 // pred_fallthru
        _
      %p320 = scmp.le.s32.totalorder 1, %s26
      %p321 = scmp.lt.s32.totalorder %s26, 3
      %p322 = pnand %p320, %p321
      %p323 = pneg %p322
      // Predicated region
      $region41: #{tpu_custom_call.1} parent=5 // pred_check
        _
      $region42: #{tpu_custom_call.1} parent=5 // pred_check_branch
        %325 = sbr.rel (%p322) target = $region44
      $region43: #{tpu_custom_call.1} parent=5 // pred_region
        %s326 = ssub.s32 %s26, 1
        %s327 = sand.u32 %s51, 1
        %s328 = scalar_lea.sflag [#allocation3], %s327
        %s329 = sand.u32 %s51, 1
        %s330 = smul.addr %s329, 8
        %s331 = scalar_lea.vmem [#allocation2], %s330
        // Predicated region
        $region45: #{tpu_custom_call.1} parent=43 // pred_check
          %p332 = pneg %p64
        $region46: #{tpu_custom_call.1} parent=43 // pred_check_branch
          %334 = sbr.rel (%p332) target = $region48
        $region47: #{tpu_custom_call.1} parent=43 // pred_region
          %335 = dma.done %s328, 128
        $region48: #{tpu_custom_call.1} parent=43 // pred_fallthru
          _
        %s336 = sand.u32 %s31, 1
        %s337 = scalar_lea.sflag [#allocation6], %s336
        %s338 = sand.u32 %s77, 1
        %s339 = smul.addr %s338, 8
        %s340 = scalar_lea.vmem [#allocation5], %s339
        // Predicated region
        $region49: #{tpu_custom_call.1} parent=43 // pred_check
          %p341 = pneg %p90
        $region50: #{tpu_custom_call.1} parent=43 // pred_check_branch
          %343 = sbr.rel (%p341) target = $region52
        $region51: #{tpu_custom_call.1} parent=43 // pred_region
          %344 = dma.done %s337, 128
        $region52: #{tpu_custom_call.1} parent=43 // pred_fallthru
          _
        // Predicated region
        $region53: #{tpu_custom_call.1} parent=43 // pred_check
          %p345 = pneg %p158
        $region54: #{tpu_custom_call.1} parent=43 // pred_check_branch
          %347 = sbr.rel (%p345) target = $region56
        $region55: #{tpu_custom_call.1} parent=43 // pred_region
          %348 = dma.done [#allocation6], 1024
        $region56: #{tpu_custom_call.1} parent=43 // pred_fallthru
          _
        %s349 = sand.u32 %s51, 1
        %s350 = scalar_lea.sflag [#allocation3], %s349
        %s351 = sand.u32 %s51, 1
        %s352 = smul.addr %s351, 8
        %s353 = scalar_lea.vmem [#allocation2], %s352
        %p354 = pneg %p64
        %p355 = pneg %p61
        %s356 = sand.u32 %s31, 1
        %s357 = scalar_lea.sflag [#allocation6], %s356
        %s358 = sand.u32 %s77, 1
        %s359 = smul.addr %s358, 8
        %s360 = scalar_lea.vmem [#allocation5], %s359
        %p361 = pneg %p90
        %p362 = pneg %p87
        %p363 = pneg %p111
        %p364 = pneg %p108
        %p365 = pneg %p132
        %p366 = pneg %p129
        %p367 = pneg %p158
        %p368 = pneg %p155
        %p369 = scmp.lt.s32.totalorder %s36, 0
        %s370 = scalar_select %p369, %s36, 0
        %s371 = scalar_lea.vmem %s5, %s370
        %p372 = pneg %p184
        %p373 = pneg %p181
        %p374 = pneg %p212
        %p375 = pneg %p209
        %s376 = sand.u32 %s199, 1
        %s377 = scalar_lea.sflag [#allocation4], %s376
        %s378 = sand.u32 %s199, 1
        %s379 = smul.addr %s378, 8
        %s380 = scalar_lea.vmem [#allocation8], %s379
        %p381 = pneg %p238
        %p382 = pneg %p235
        %s383 = sand.u32 %s225, 1
        %s384 = scalar_lea.sflag [#allocation10], %s383
        %s385 = sand.u32 %s225, 1
        %s386 = smul.addr %s385, 8
        %s387 = scalar_lea.vmem [#allocation9], %s386
        %p388 = scmp.lt.s32.totalorder %s36, 0
        %s389 = scalar_select %p388, %s36, 0
        %s390 = scalar_lea.vmem %s5, %s389
        %v392 = vld [vmem:[%s340] sm:$0xff]
        %v393 = vld [vmem:[%s331] sm:$0xff]
        %v394 = vadd.f32 %v392, %v393
        %p395 = scmp.eq.s32.totalorder %s36, 0
        // Predicated region
        $region57: #{tpu_custom_call.1} parent=43 // pred_check
          %p396 = pneg %p395
        $region58: #{tpu_custom_call.1} parent=43 // pred_check_branch
          %398 = sbr.rel (%p396) target = $region60
        $region59: #{tpu_custom_call.1} parent=43 // pred_region
          %399 = vst [vmem:[%s387] sm:$0xff] %v394
        $region60: #{tpu_custom_call.1} parent=43 // pred_fallthru
          _
        %400 = vadd.xlane.f32.xlu0 %v394
        %v401 = vpop.xlane.xlu0 %400
        %v402 = vmul.f32 %v401, 0.03125
        %v403 = vsub.f32 %v394, %v402
        %v404 = vlaneseq
        %v405 = vand.u32 %v404, 127
        %vm406 = vcmp.lt.s32.totalorder %v405, 32
        %v407 = vsel %vm406, 1, 0
        %v408 = vcvt.s32.f32 %v407
        %v409 = vmul.f32 %v403, %v408
        %v410 = vmul.f32 %v409, %v409
        %411 = vadd.xlane.f32.xlu0 %v410
        %v412 = vpop.xlane.xlu0 %411
        %v413 = vmul.f32 %v412, 0.03125
        %v414 = vadd.f32 %v413, 1e-05
        %v415 = vrsqrt.pop %v414
        %v416 = vmul.f32 %v403, %v415
        %v417 = vld [vmem:[%s2] sm:$0x1]
        %v419 = vlaneseq
        %v420 = vshrl.u32 %v419, 7
        %v421 = vsub.s32 0, %v420
        %v422 = vrot.slane %v417, %v421
        %v424 = vmul.f32 %v416, %v422
        %v425 = vld [vmem:[%s3] sm:$0x1]
        %v427 = vlaneseq
        %v428 = vshrl.u32 %v427, 7
        %v429 = vsub.s32 0, %v428
        %v430 = vrot.slane %v425, %v429
        %v432 = vadd.f32 %v424, %v430
        %v433 = vpack.c.bf16 %v432, %v432
        %v434 = vld [vmem:[#allocation7] sm:$0xf]
        %v435 = vld [vmem:[#allocation7 + $0x4] sm:$0xf]
        %v436 = vld [vmem:[#allocation7 + $0x8] sm:$0xf]
        %v437 = vld [vmem:[#allocation7 + $0xc] sm:$0xf]
        %v438 = vld [vmem:[#allocation7 + $0x10] sm:$0xf]
        %v439 = vld [vmem:[#allocation7 + $0x14] sm:$0xf]
        %v440 = vld [vmem:[#allocation7 + $0x18] sm:$0xf]
        %v441 = vld [vmem:[#allocation7 + $0x1c] sm:$0xf]
        %v442 = vld [vmem:[#allocation7 + $0x20] sm:$0xf]
        %v443 = vld [vmem:[#allocation7 + $0x24] sm:$0xf]
        %v444 = vld [vmem:[#allocation7 + $0x28] sm:$0xf]
        %v445 = vld [vmem:[#allocation7 + $0x2c] sm:$0xf]
        %v446 = vld [vmem:[#allocation7 + $0x30] sm:$0xf]
        %v447 = vld [vmem:[#allocation7 + $0x34] sm:$0xf]
        %v448 = vld [vmem:[#allocation7 + $0x38] sm:$0xf]
        %v449 = vld [vmem:[#allocation7 + $0x3c] sm:$0xf]
        %v450 = vld [vmem:[%s390] sm:$0x1]
        %v452 = vlaneseq
        %v453 = vshrl.u32 %v452, 7
        %v454 = vsub.s32 0, %v453
        %v455 = vrot.slane %v450, %v454
        %v473 = vunpack.c.l.b16 %v434
        %v474 = vunpack.c.l.b16 %v435
        %v475 = vunpack.c.l.b16 %v436
        %v476 = vunpack.c.l.b16 %v437
        %v477 = vunpack.c.l.b16 %v438
        %v478 = vunpack.c.l.b16 %v439
        %v479 = vunpack.c.l.b16 %v440
        %v480 = vunpack.c.l.b16 %v441
        %v481 = vunpack.c.l.b16 %v442
        %v482 = vunpack.c.l.b16 %v443
        %v483 = vunpack.c.l.b16 %v444
        %v484 = vunpack.c.l.b16 %v445
        %v485 = vunpack.c.l.b16 %v446
        %v486 = vunpack.c.l.b16 %v447
        %v487 = vunpack.c.l.b16 %v448
        %v488 = vunpack.c.l.b16 %v449
        %v489 = vpack.c.b16 %v474, %v473
        %v490 = vpack.c.b16 %v476, %v475
        %v491 = vpack.c.b16 %v478, %v477
        %v492 = vpack.c.b16 %v480, %v479
        %v493 = vpack.c.b16 %v482, %v481
        %v494 = vpack.c.b16 %v484, %v483
        %v495 = vpack.c.b16 %v486, %v485
        %v496 = vpack.c.b16 %v488, %v487
        %505 = vmatprep.subr.bf16.mxu0 0
        %506 = vmatpush1.bf16.msra.mxu0 %v496
        %507 = vmatprep.subr.bf16.mxu0 0
        %508 = vmatpush1.bf16.msra.mxu0 %v495
        %509 = vmatprep.subr.bf16.mxu0 0
        %510 = vmatpush1.bf16.msra.mxu0 %v494
        %511 = vmatprep.subr.bf16.mxu0 0
        %512 = vmatpush1.bf16.msra.mxu0 %v493
        %513 = vmatprep.subr.bf16.mxu0 0
        %514 = vmatpush1.bf16.msra.mxu0 %v492
        %515 = vmatprep.subr.bf16.mxu0 0
        %516 = vmatpush1.bf16.msra.mxu0 %v491
        %517 = vmatprep.subr.bf16.mxu0 0
        %518 = vmatpush1.bf16.msra.mxu0 %v490
        %519 = vmatprep.subr.bf16.mxu0 0
        %520 = vmatpush1.bf16.msra.mxu0 %v489
        %521 = vmatprep.subr.bf16.mxu0 0
        %522 = vmatpush2.bf16.msra.mxu0 0
        %523 = vmatprep.subr.bf16.mxu0 0
        %524 = vmatpush2.bf16.msra.mxu0 0
        %525 = vmatprep.subr.bf16.mxu0 0
        %526 = vmatpush2.bf16.msra.mxu0 0
        %527 = vmatprep.subr.bf16.mxu0 0
        %528 = vmatpush2.bf16.msra.mxu0 0
        %529 = vmatprep.subr.bf16.mxu0 0
        %530 = vmatpush2.bf16.msra.mxu0 0
        %531 = vmatprep.subr.bf16.mxu0 0
        %532 = vmatpush2.bf16.msra.mxu0 0
        %533 = vmatprep.subr.bf16.mxu0 0
        %534 = vmatpush2.bf16.msra.mxu0 0
        %535 = vmatprep.subr.bf16.mxu0 0
        %536 = vmatpush2.bf16.msra.mxu0 0
        %537 = vmatprep.mubr.bf16.mxu0 0
        %538 = vmatmul.mubr.bf16.gmra.mxu0 %v433
        %v539 = vpop.f32.mrf.mxu0
        %v540 = vadd.f32 %v455, %v539
        %v541 = vpop.f32.mrf.mxu0
        %v542 = vpop.f32.mrf.mxu0
        %v543 = vpop.f32.mrf.mxu0
        %544 = vdwg.mxu0
        %545 = vst [vmem:[%s380] sm:$0xff] %v540
        %s546 = sand.u32 %s199, 1
        %s547 = scalar_lea.sflag [#allocation4], %s546
        %s548 = sand.u32 %s199, 1
        %s549 = smul.addr %s548, 8
        %s550 = scalar_lea.vmem [#allocation8], %s549
        %s551 = sand.u32 %s225, 1
        %s552 = scalar_lea.sflag [#allocation10], %s551
        %s553 = sand.u32 %s225, 1
        %s554 = smul.addr %s553, 8
        %s555 = scalar_lea.vmem [#allocation9], %s554
        // Predicated region
        $region61: #{tpu_custom_call.1} parent=43 // pred_check
          %p556 = pneg %p209
        $region62: #{tpu_custom_call.1} parent=43 // pred_check_branch
          %558 = sbr.rel (%p556) target = $region64
        $region63: #{tpu_custom_call.1} parent=43 // pred_region
          %s560 = ssub.s32 128, 128
          %561 = vsyncadd %s547, %s560
          %s562 = sadd.s32 %s36, %s35
          %s563 = smul.addr %s562, 128
          %s564 = scalar_lea.hbm %s6, %s563
          %s566 = sshll.u32 %s550, 4
          %s567 = int_to_ptr.vmem [resolvable:$true] %s566
          %569 = dma.vmem_to_hbm [thread:$0]  %s567, 128, %s564, %s547
        $region64: #{tpu_custom_call.1} parent=43 // pred_fallthru
          _
        // Predicated region
        $region65: #{tpu_custom_call.1} parent=43 // pred_check
          %p570 = pneg %p235
        $region66: #{tpu_custom_call.1} parent=43 // pred_check_branch
          %572 = sbr.rel (%p570) target = $region68
        $region67: #{tpu_custom_call.1} parent=43 // pred_region
          %s574 = ssub.s32 128, 128
          %575 = vsyncadd %s552, %s574
          %s576 = smul.addr %s35, 128
          %s577 = scalar_lea.hbm %s7, %s576
          %s579 = sshll.u32 %s555, 4
          %s580 = int_to_ptr.vmem [resolvable:$true] %s579
          %582 = dma.vmem_to_hbm [thread:$0]  %s580, 128, %s577, %s552
        $region68: #{tpu_custom_call.1} parent=43 // pred_fallthru
          _
      $region44: #{tpu_custom_call.1} parent=5 // pred_fallthru
        _
      %p583 = scmp.le.s32.totalorder 2, %s26
      // Predicated region
      $region69: #{tpu_custom_call.1} parent=5 // pred_check
        %p584 = pneg %p583
      $region70: #{tpu_custom_call.1} parent=5 // pred_check_branch
        %586 = sbr.rel (%p584) target = $region72
      $region71: #{tpu_custom_call.1} parent=5 // pred_region
        %s587 = ssub.s32 %s26, 2
        // Predicated region
        $region73: #{tpu_custom_call.1} parent=71 // pred_check
          %p588 = pneg %p215
        $region74: #{tpu_custom_call.1} parent=71 // pred_check_branch
          %590 = sbr.rel (%p588) target = $region76
        $region75: #{tpu_custom_call.1} parent=71 // pred_region
          %s591 = sand.u32 %s200, 1
          %s592 = scalar_lea.sflag [#allocation4], %s591
          %s593 = sand.u32 %s200, 1
          %s594 = smul.addr %s593, 8
          %s595 = scalar_lea.vmem [#allocation8], %s594
          %596 = dma.done %s592, 128
        $region76: #{tpu_custom_call.1} parent=71 // pred_fallthru
          _
        // Predicated region
        $region77: #{tpu_custom_call.1} parent=71 // pred_check
          %p597 = pneg %p241
        $region78: #{tpu_custom_call.1} parent=71 // pred_check_branch
          %599 = sbr.rel (%p597) target = $region80
        $region79: #{tpu_custom_call.1} parent=71 // pred_region
          %s600 = sand.u32 %s226, 1
          %s601 = scalar_lea.sflag [#allocation10], %s600
          %s602 = sand.u32 %s226, 1
          %s603 = smul.addr %s602, 8
          %s604 = scalar_lea.vmem [#allocation9], %s603
          %605 = dma.done %s601, 128
        $region80: #{tpu_custom_call.1} parent=71 // pred_fallthru
          _
      $region72: #{tpu_custom_call.1} parent=5 // pred_fallthru
        _
    $region6: #{tpu_custom_call.1} parent=1 // loop_footer
      %s30 = sadd.s32 1, %s26
    $region7: #{tpu_custom_call.1} parent=1 // loop_footer_branch
      %25 = sbr.rel target = $region3
    $region8: #{tpu_custom_call.1} parent=1 // loop_exit
      _
    %606 = vsyncpa [#allocation3], 1
    %s607 = scalar_lea.sflag [#allocation3], 1
    %608 = vsyncpa %s607, 1
    %609 = vsyncpa [#allocation6], 1
    %s610 = scalar_lea.sflag [#allocation6], 1
    %611 = vsyncpa %s610, 1
    %612 = vsyncpa [#allocation4], 1
    %s613 = scalar_lea.sflag [#allocation4], 1
    %614 = vsyncpa %s613, 1
    %615 = vsyncpa [#allocation10], 1
    %s616 = scalar_lea.sflag [#allocation10], 1
    %617 = vsyncpa %s616, 1

</llo_original>
